<compile_context>
chip_gen: v5e
topology: v5e:2x2
jax: 0.10.0
libtpu: 0.0.40
codegen_flags: <defaults>
</compile_context>

<pallas_src>
import functools

import jax
import jax.numpy as jnp
import numpy as np
from jax import lax
from jax.experimental import pallas as pl
from jax.experimental.pallas import tpu as pltpu


# ----------------------- tiled linear: y = x @ W_t + b ---------------------- #

def _linear_kernel(x_ref, w_ref, b_ref, o_ref, acc_ref):
    @pl.when(pl.program_id(2) == 0)
    def _init():
        acc_ref[...] = jnp.zeros_like(acc_ref)

    acc_ref[...] += jnp.dot(x_ref[...], w_ref[...],
                            preferred_element_type=jnp.float32)

    @pl.when(pl.program_id(2) == pl.num_programs(2) - 1)
    def _finish():
        o_ref[...] = (acc_ref[...] + b_ref[...]).astype(o_ref.dtype)


def _k_tile(K, target=512):
    """Largest lane-aligned tile dividing K exactly (reduction axis must not pad)."""
    if K <= target:
        return K
    t = (target // 128) * 128
    while t >= 128:
        if K % t == 0:
            return t
        t -= 128
    return K


def tiled_linear(x2d, w_t, b, *, out_dtype=None, tm=1024, tn=1024, tk=512):
    """x2d: (M, K) bf16, w_t: (K, N) bf16, b: (N,) f32 -> (M, N) out_dtype."""
    M, K = x2d.shape
    N = w_t.shape[1]
    out_dtype = out_dtype or x2d.dtype
    tm = min(tm, M)
    tn = min(tn, N)
    tk = _k_tile(K, tk)
    grid = (pl.cdiv(M, tm), pl.cdiv(N, tn), K // tk)
    cost = pl.CostEstimate(
        flops=2 * M * N * K,
        transcendentals=0,
        bytes_accessed=int(M * K * np.dtype(x2d.dtype).itemsize
                           + K * N * np.dtype(w_t.dtype).itemsize * grid[0]
                           + M * N * np.dtype(out_dtype).itemsize))
    return pl.pallas_call(
        _linear_kernel,
        out_shape=jax.ShapeDtypeStruct((M, N), out_dtype),
        grid=grid,
        in_specs=[
            pl.BlockSpec((tm, tk), lambda i, j, k: (i, k)),
            pl.BlockSpec((tk, tn), lambda i, j, k: (k, j)),
            pl.BlockSpec((1, tn), lambda i, j, k: (0, j)),
        ],
        out_specs=pl.BlockSpec((tm, tn), lambda i, j, k: (i, j)),
        scratch_shapes=[pltpu.VMEM((tm, tn), jnp.float32)],
        compiler_params=pltpu.CompilerParams(
            dimension_semantics=("parallel", "parallel", "arbitrary"),
            vmem_limit_bytes=32 * 1024 * 1024),
        cost_estimate=cost,
    )(x2d, w_t, b.astype(jnp.float32).reshape(1, N))


# ------------------------------ attention kernel ----------------------------- #

def _attn_kernel(q_ref, k_ref, v_ref, o_ref, *, heads_per_block, dp, scale):
    # q_ref: (1, Sq, Hb*Dp); k_ref/v_ref: (1, Sk, Hb*Dp); o_ref: (1, Sq, Hb*Dp).
    # dp % 128 == 0, so every per-head slice / store below is lane-dense
    # (no relayout loads, no masked partial stores).
    for h in range(heads_per_block):        # Hb is VMEM-budgeted -> bounded temps
        lo = h * dp
        hi = lo + dp
        q = q_ref[0, :, lo:hi]                                     # (Sq, Dp) bf16
        k = k_ref[0, :, lo:hi]                                     # (Sk, Dp) bf16
        v = v_ref[0, :, lo:hi]                                     # (Sk, Dp) bf16
        # scores: contract last dims directly (no materialized k.T), f32 acc
        s = lax.dot_general(q, k, (((1,), (1,)), ((), ())),
                            preferred_element_type=jnp.float32)    # (Sq, Sk) f32
        s = s * scale                                              # f32 scale
        s = s - jnp.max(s, axis=-1, keepdims=True)
        p = jnp.exp(s)
        inv = pl.reciprocal(jnp.sum(p, axis=-1, keepdims=True), approx=True)
        p = (p * inv).astype(v.dtype)                              # bf16 for MXU
        o = lax.dot_general(p, v, (((1,), (0,)), ((), ())),
                            preferred_element_type=jnp.float32)    # (Sq, Dp)
        o_ref[0, :, lo:hi] = o.astype(o_ref.dtype)


def _pick_head_group(heads, dp, s_txt, s_img, *, bytes_per_el=2,
                     budget=12 * 1024 * 1024):
    """Largest divisor Hb of `heads` whose double-buffered blocks fit `budget`."""
    best = 1
    for hb in range(1, heads + 1):
        if heads % hb:
            continue
        block_bytes = hb * dp * (2 * s_txt + 2 * s_img) * bytes_per_el
        total = 2 * block_bytes + 2 * s_txt * s_img * 4   # + f32 score/prob temps
        if total <= budget:
            best = hb
    return best


# --------------------------- one-time weight prep ---------------------------- #

def prepare_params(params, heads, hidden):
    """Pad head_dim to a multiple of 128, fuse K/V weights, cast to bf16.

    Done ONCE outside the forward pass (hoisted per perf review)."""
    D = hidden // heads
    Dp = ((D + 127) // 128) * 128

    def pad_out_features(w_t, b):
        # (H, H) columns ordered (heads, D) -> (H, heads*Dp), pad cols with zeros
        w = w_t.reshape(hidden, heads, D)
        w = jnp.pad(w, ((0, 0), (0, 0), (0, Dp - D)))
        b2 = jnp.pad(b.reshape(heads, D), ((0, 0), (0, Dp - D)))
        return (w.reshape(hidden, heads * Dp).astype(jnp.bfloat16),
                b2.reshape(heads * Dp).astype(jnp.float32))

    wq, bq = pad_out_features(params["wq_t"], params["bq"])
    wk, bk = pad_out_features(params["wk_t"], params["bk"])
    wv, bv = pad_out_features(params["wv_t"], params["bv"])

    # Fused K/V projection weight: img is read once, one matmul with N = 2*heads*Dp.
    wkv = jnp.concatenate([wk, wv], axis=1)
    bkv = jnp.concatenate([bk, bv])

    # Output projection: pad the *input* (row) side per head with zero rows so
    # the padded attention columns are annihilated.
    wo = params["wo_t"].reshape(heads, D, hidden)
    wo = jnp.pad(wo, ((0, 0), (0, Dp - D), (0, 0))).reshape(heads * Dp, hidden)

    return {
        "wq_pad_t": wq, "bq_pad": bq,
        "wkv_pad_t": wkv, "bkv_pad": bkv,
        "wo_pad_t": wo.astype(jnp.bfloat16),
        "bo": params["bo"].astype(jnp.float32),
        "heads": heads, "head_dim": D, "head_dim_padded": Dp, "hidden": hidden,
    }


# ------------------------------ forward wrapper ------------------------------ #

def lora_cross_attention_itot_forward(img, text, prep):
    """img: (B, S_img, H), text: (B, S_txt, H) -> (B, S_txt, H) float32."""
    B, S_img, H = img.shape
    _, S_txt, _ = text.shape
    heads = prep["heads"]
    D = prep["head_dim"]
    Dp = prep["head_dim_padded"]
    assert H == prep["hidden"] and H % heads == 0
    scale = float(D) ** (-0.5)

    # bf16 activation streams (halves HBM bytes into the projection kernels).
    x_txt = text.reshape(B * S_txt, H).astype(jnp.bfloat16)
    x_img = img.reshape(B * S_img, H).astype(jnp.bfloat16)

    # Q projection (head-dim padded layout).
    q = tiled_linear(x_txt, prep["wq_pad_t"], prep["bq_pad"])
    q = q.reshape(B, S_txt, heads * Dp)

    # Fused K/V projection: one matmul, img read once.
    kv = tiled_linear(x_img, prep["wkv_pad_t"], prep["bkv_pad"])
    kv = kv.reshape(B, S_img, 2 * heads * Dp)
    # detach-mixing of key/value in the reference is a forward-pass no-op.

    # Head grouping: Hb heads per grid step, lane-dense, VMEM-budgeted.
    Hb = _pick_head_group(heads, Dp, S_txt, S_img)
    G = heads // Hb

    cost = pl.CostEstimate(
        flops=4 * B * heads * S_txt * S_img * Dp,
        transcendentals=B * heads * S_txt * S_img,
        bytes_accessed=int((q.size + kv.size) * 2 + B * S_txt * heads * Dp * 2))

    attn_out = pl.pallas_call(
        functools.partial(_attn_kernel, heads_per_block=Hb, dp=Dp, scale=scale),
        out_shape=jax.ShapeDtypeStruct((B, S_txt, heads * Dp), jnp.bfloat16),
        grid=(B, G),
        in_specs=[
            # q: head-group g of the (padded) hidden dim
            pl.BlockSpec((1, S_txt, Hb * Dp), lambda b, g: (b, 0, g)),
            # k: first half of the fused kv tensor
            pl.BlockSpec((1, S_img, Hb * Dp), lambda b, g: (b, 0, g)),
            # v: second half of the fused kv tensor
            pl.BlockSpec((1, S_img, Hb * Dp), lambda b, g: (b, 0, G + g)),
        ],
        out_specs=pl.BlockSpec((1, S_txt, Hb * Dp), lambda b, g: (b, 0, g)),
        compiler_params=pltpu.CompilerParams(
            dimension_semantics=("parallel", "parallel"),
            vmem_limit_bytes=32 * 1024 * 1024),
        cost_estimate=cost,
    )(q, kv, kv)

    # Output projection on the padded (B, S_txt, heads*Dp) attention result;
    # zero rows of wo_pad_t remove the pad columns. Final output in f32.
    out = tiled_linear(attn_out.reshape(B * S_txt, heads * Dp),
                       prep["wo_pad_t"], prep["bo"], out_dtype=jnp.float32)
    return out.reshape(B, S_txt, H)


# --------------------------------- reference --------------------------------- #

def reference_forward(img, text, params, heads):
    B, S_img, H = img.shape
    _, S_txt, _ = text.shape
    D = H // heads
    scale = float(D) ** (-0.5)

    q = text @ params["wq_t"] + params["bq"]
    k = img @ params["wk_t"] + params["bk"]
    v = img @ params["wv_t"] + params["bv"]

    def h2b(t, S):
        return t.reshape(B, S, heads, D).transpose(0, 2, 1, 3)

    qh, kh, vh = h2b(q, S_txt), h2b(k, S_img), h2b(v, S_img)
    s = scale * jnp.einsum("bhqd,bhkd->bhqk", qh, kh)
    p = jax.nn.softmax(s, axis=-1)
    oh = jnp.einsum("bhqk,bhkd->bhqd", p, vh)
    o = oh.transpose(0, 2, 1, 3).reshape(B, S_txt, H)
    return o @ params["wo_t"] + params["bo"]


# ------------------------------------ main ------------------------------------ #

if __name__ == "__main__":
    # Small shapes consistent with the module's forward:
    #   hidden divisible by heads=8; img = key/value sequence, text = queries.
    B, heads = 2, 8
    hidden = 128          # module default 1536
    S_img = 64            # module default img_dim=1024
    S_txt = 16            # module default text_dim=77

    key = jax.random.PRNGKey(0)
    k_img, k_txt, kq, kk, kv_, ko, kb = jax.random.split(key, 7)

    img = jax.random.normal(k_img, (B, S_img, hidden), dtype=jnp.float32)
    text = jax.random.normal(k_txt, (B, S_txt, hidden), dtype=jnp.float32)

    # NOTE: the module zero-inits to_q/to_k/to_v/to_out weights (LoRA-style);
    # we use deterministic random values so the kernel compute is non-trivial.
    def init_w(k_):
        return 0.02 * jax.random.normal(k_, (hidden, hidden), dtype=jnp.float32)

    biases = 0.01 * jax.random.normal(kb, (4, hidden), dtype=jnp.float32)
    params = {
        "wq_t": init_w(kq), "bq": biases[0],
        "wk_t": init_w(kk), "bk": biases[1],
        "wv_t": init_w(kv_), "bv": biases[2],
        "wo_t": init_w(ko), "bo": biases[3],
    }

    # One-time weight prep (bf16 cast, head-dim padding, K/V fusion) — hoisted
    # out of the forward pass per the performance review.
    prep = prepare_params(params, heads, hidden)

    out = lora_cross_attention_itot_forward(img, text, prep)
    out = jax.block_until_ready(out)

    ref = reference_forward(img, text, params, heads)
    ref = jax.block_until_ready(ref)

    assert out.shape == (B, S_txt, hidden), out.shape
    # bf16 MXU operands + approx reciprocal differ from the f32 reference in
    # low-order bits; tolerance set accordingly.
    np.testing.assert_allclose(np.asarray(out), np.asarray(ref),
                               atol=2.5e-2, rtol=2.5e-2)

    print("KERNEL_OK")
</pallas_src>

<mosaic_0001>
module attributes {stable_mosaic.version = 11 : i64} {
  func.func @_linear_kernel(%arg0: i32, %arg1: i32, %arg2: i32, %arg3: memref<32x128xbf16, #tpu.memory_space<vmem>>, %arg4: memref<128x1024xbf16, #tpu.memory_space<vmem>>, %arg5: memref<1x1024xf32, #tpu.memory_space<vmem>>, %arg6: memref<32x1024xbf16, #tpu.memory_space<vmem>>, %arg7: memref<32x1024xf32, #tpu.memory_space<vmem>>) attributes {dimension_semantics = [#tpu.dimension_semantics<parallel>, #tpu.dimension_semantics<parallel>, #tpu.dimension_semantics<arbitrary>], iteration_bounds = array<i64: 1, 1, 1>, scalar_prefetch = 0 : i64, scratch_operands = 1 : i64, tpu.core_type = #tpu.core_type<tc>, window_params = [{transform_indices = @transform_0, window_bounds = array<i64: 32, 128>}, {transform_indices = @transform_1, window_bounds = array<i64: 128, 1024>}, {transform_indices = @transform_2, window_bounds = array<i64: 1, 1024>}, {transform_indices = @transform_3, window_bounds = array<i64: 32, 1024>}]} {
    %c0_i32 = arith.constant 0 : i32
    %0 = arith.cmpi eq, %arg2, %c0_i32 : i32
    %1 = arith.extui %0 : i1 to i32
    %c0_i32_0 = arith.constant 0 : i32
    %2 = arith.cmpi ne, %1, %c0_i32_0 : i32
    scf.if %2 {
      %cst_10 = arith.constant 0.000000e+00 : f32
      %12 = vector.broadcast %cst_10 : f32 to vector<32x1024xf32>
      %c0_11 = arith.constant 0 : index
      %c0_12 = arith.constant 0 : index
      %13 = vector.load %arg7[%c0_11, %c0_12] : memref<32x1024xf32, #tpu.memory_space<vmem>>, vector<32x1024xf32>
      tpu.vector_store %arg7[%c0_11, %c0_12], %12 {strides = array<i32>} : memref<32x1024xf32, #tpu.memory_space<vmem>>, vector<32x1024xf32>,
    } else {
    }
    %c0 = arith.constant 0 : index
    %c0_1 = arith.constant 0 : index
    %3 = vector.load %arg7[%c0, %c0_1] : memref<32x1024xf32, #tpu.memory_space<vmem>>, vector<32x1024xf32>
    %c0_2 = arith.constant 0 : index
    %c0_3 = arith.constant 0 : index
    %4 = vector.load %arg3[%c0_2, %c0_3] : memref<32x128xbf16, #tpu.memory_space<vmem>>, vector<32x128xbf16>
    %c0_4 = arith.constant 0 : index
    %c0_5 = arith.constant 0 : index
    %5 = vector.load %arg4[%c0_4, %c0_5] : memref<128x1024xbf16, #tpu.memory_space<vmem>>, vector<128x1024xbf16>
    %cst = arith.constant dense<0.000000e+00> : vector<32x1024xf32>
    %6 = tpu.matmul %4, %5, %cst {dimension_numbers = #tpu.dot_dimension_numbers<[1], [0], [0], [1], [0, 0, 1, 1], [], []>} : vector<32x128xbf16>, vector<128x1024xbf16>, vector<32x1024xf32> -> vector<32x1024xf32>
    %7 = arith.addf %3, %6 : vector<32x1024xf32>
    %c0_6 = arith.constant 0 : index
    %c0_7 = arith.constant 0 : index
    %8 = vector.load %arg7[%c0_6, %c0_7] : memref<32x1024xf32, #tpu.memory_space<vmem>>, vector<32x1024xf32>
    tpu.vector_store %arg7[%c0_6, %c0_7], %7 {strides = array<i32>} : memref<32x1024xf32, #tpu.memory_space<vmem>>, vector<32x1024xf32>,
    %c0_i32_8 = arith.constant 0 : i32
    %9 = arith.cmpi eq, %arg2, %c0_i32_8 : i32
    %10 = arith.extui %9 : i1 to i32
    %c0_i32_9 = arith.constant 0 : i32
    %11 = arith.cmpi ne, %10, %c0_i32_9 : i32
    scf.if %11 {
      %c0_10 = arith.constant 0 : index
      %c0_11 = arith.constant 0 : index
      %12 = vector.load %arg7[%c0_10, %c0_11] : memref<32x1024xf32, #tpu.memory_space<vmem>>, vector<32x1024xf32>
      %c0_12 = arith.constant 0 : index
      %c0_13 = arith.constant 0 : index
      %13 = vector.load %arg5[%c0_12, %c0_13] : memref<1x1024xf32, #tpu.memory_space<vmem>>, vector<1x1024xf32>
      %14 = vector.broadcast %13 : vector<1x1024xf32> to vector<32x1024xf32>
      %15 = arith.addf %12, %14 : vector<32x1024xf32>
      %16 = arith.truncf %15 : vector<32x1024xf32> to vector<32x1024xbf16>
      %c0_14 = arith.constant 0 : index
      %c0_15 = arith.constant 0 : index
      %17 = vector.load %arg6[%c0_14, %c0_15] : memref<32x1024xbf16, #tpu.memory_space<vmem>>, vector<32x1024xbf16>
      tpu.vector_store %arg6[%c0_14, %c0_15], %16 {strides = array<i32>} : memref<32x1024xbf16, #tpu.memory_space<vmem>>, vector<32x1024xbf16>,
    } else {
    }
    return
  }
  func.func @transform_0(%arg0: i32, %arg1: i32, %arg2: i32) -> (i32, i32) {
    %c0_i32 = arith.constant 0 : i32
    return %arg0, %arg2 : i32, i32
  }
  func.func @transform_1(%arg0: i32, %arg1: i32, %arg2: i32) -> (i32, i32) {
    %c0_i32 = arith.constant 0 : i32
    return %arg2, %arg1 : i32, i32
  }
  func.func @transform_2(%arg0: i32, %arg1: i32, %arg2: i32) -> (i32, i32) {
    %c0_i32 = arith.constant 0 : i32
    %c0_i32_0 = arith.constant 0 : i32
    return %c0_i32, %arg1 : i32, i32
  }
  func.func @transform_3(%arg0: i32, %arg1: i32, %arg2: i32) -> (i32, i32) {
    %c0_i32 = arith.constant 0 : i32
    return %arg0, %arg1 : i32, i32
  }
}

</mosaic_0001>

<llo_original>
// kernel: tpu_custom_call.1
$region0: #{tpu_custom_call.1}
  #allocation0 [shape = 'u32[]', space=smem, size = 0x4, offset = 0x4, fixed_abs, tag = 'smem constant byte address 0x4 - core index']
  #allocation1 [shape = 'u32[72,128]{1,0:T(1,128)}', space=vmem, size = 0x9000, scoped, tag = 'internal scratch']
  #allocation2 [shape = 'f32[32,1024]{1,0:T(8,128)}', space=vmem, size = 0x20000, scoped, tag = 'scratch operand']
  %s0 = inlined_call_operand.hbm [shape: bf16[32,128], index: 0, kind: input, shape index: {}]
  %s1 = inlined_call_operand.hbm [shape: bf16[128,1024], index: 1, kind: input, shape index: {}]
  %s2 = inlined_call_operand.hbm [shape: f32[1,1024], index: 2, kind: input, shape index: {}]
  %s3 = inlined_call_operand.hbm [shape: bf16[32,1024], index: 3, kind: output, shape index: {}]
  %s4 = sld [smem:[#allocation0]]
  $region42: #{tpu_custom_call.1} parent=0
    _
  %s6 = ssub.s32 1, %s4
  %s7 = scalar_select 0, %s6, %s4
  $region1: #{tpu_custom_call.1} parent=0
    #allocation3 [shape = 'u8[8192]{0}', space=vmem, size = 0x2000, scoped, tag = 'input window, operand 0, single buffered']
    #allocation4 [shape = 's32[1]{0}', space=sflag, size = 0x4, scoped, tag = 'scoped memory for tpu_custom_call.1']
    #allocation5 [shape = 's32[1]{0}', space=sflag, size = 0x4, scoped, tag = 'scoped memory for tpu_custom_call.1']
    #allocation6 [shape = 'u8[262144]{0}', space=vmem, size = 0x40000, scoped, tag = 'input window, operand 1, single buffered']
    #allocation7 [shape = 's32[1]{0}', space=sflag, size = 0x4, scoped, tag = 'scoped memory for tpu_custom_call.1']
    #allocation8 [shape = 'u8[4096]{0}', space=vmem, size = 0x1000, scoped, tag = 'input window, operand 2, single buffered']
    #allocation9 [shape = 'u8[65536]{0}', space=vmem, size = 0x10000, scoped, tag = 'output window, operand 0, single buffered']
    %8 = vsyncpa [#allocation4], 0
    %9 = vsyncpa [#allocation7], 0
    %10 = vsyncpa [#allocation5], 0
    // Predicated region
    $region2: #{tpu_custom_call.1} parent=1 // pred_check
      _
    $region3: #{tpu_custom_call.1} parent=1 // pred_check_branch
      %12 = sbr.rel (0) target = $region5
    $region4: #{tpu_custom_call.1} parent=1 // pred_region
      %14 = vsyncadd [#allocation4], 0
      %s15 = sshll.u32 %s0, 4
      %s16 = int_to_ptr.hbm [resolvable:$true] %s15
      %s17 = sshll.u32 [#allocation3], 4
      %s18 = int_to_ptr.vmem [resolvable:$true] %s17
      %23 = dma.hbm_to_vmem [thread:$0]  %s16, 256, %s18, [#allocation4], 64, 64, 4
    $region5: #{tpu_custom_call.1} parent=1 // pred_fallthru
      _
    // Predicated region
    $region6: #{tpu_custom_call.1} parent=1 // pred_check
      _
    $region7: #{tpu_custom_call.1} parent=1 // pred_check_branch
      %25 = sbr.rel (0) target = $region9
    $region8: #{tpu_custom_call.1} parent=1 // pred_region
      %27 = vsyncadd [#allocation7], 0
      %s28 = sshll.u32 %s1, 4
      %s29 = int_to_ptr.hbm [resolvable:$true] %s28
      %s30 = sshll.u32 [#allocation6], 4
      %s31 = int_to_ptr.vmem [resolvable:$true] %s30
      %36 = dma.hbm_to_vmem [thread:$0]  %s29, 8192, %s31, [#allocation7], 512, 512, 32
    $region9: #{tpu_custom_call.1} parent=1 // pred_fallthru
      _
    // Predicated region
    $region10: #{tpu_custom_call.1} parent=1 // pred_check
      _
    $region11: #{tpu_custom_call.1} parent=1 // pred_check_branch
      %38 = sbr.rel (0) target = $region13
    $region12: #{tpu_custom_call.1} parent=1 // pred_region
      %40 = vsyncadd [#allocation7], 0
      %s42 = sshll.u32 %s2, 4
      %s43 = int_to_ptr.hbm [resolvable:$true] %s42
      %s44 = sshll.u32 [#allocation8], 4
      %s45 = int_to_ptr.vmem [resolvable:$true] %s44
      %47 = dma.hbm_to_vmem [thread:$0]  %s43, 128, %s45, [#allocation7]
    $region13: #{tpu_custom_call.1} parent=1 // pred_fallthru
      _
    // Predicated region
    $region14: #{tpu_custom_call.1} parent=1 // pred_check
      _
    $region15: #{tpu_custom_call.1} parent=1 // pred_check_branch
      %49 = sbr.rel (0) target = $region17
    $region16: #{tpu_custom_call.1} parent=1 // pred_region
      %51 = dma.done [#allocation4], 256
    $region17: #{tpu_custom_call.1} parent=1 // pred_fallthru
      _
    // Predicated region
    $region18: #{tpu_custom_call.1} parent=1 // pred_check
      _
    $region19: #{tpu_custom_call.1} parent=1 // pred_check_branch
      %53 = sbr.rel (0) target = $region21
    $region20: #{tpu_custom_call.1} parent=1 // pred_region
      %55 = dma.done [#allocation7], 8192
    $region21: #{tpu_custom_call.1} parent=1 // pred_fallthru
      _
    // Predicated region
    $region22: #{tpu_custom_call.1} parent=1 // pred_check
      _
    $region23: #{tpu_custom_call.1} parent=1 // pred_check_branch
      %57 = sbr.rel (0) target = $region25
    $region24: #{tpu_custom_call.1} parent=1 // pred_region
      %59 = dma.done [#allocation7], 128
    $region25: #{tpu_custom_call.1} parent=1 // pred_fallthru
      _
    %p60 = scmp.eq.s32.totalorder 0, 0
    // Predicated region
    $region26: #{tpu_custom_call.1} parent=1 // pred_check
      %p61 = pneg %p60
    $region27: #{tpu_custom_call.1} parent=1 // pred_check_branch
      %63 = sbr.rel (%p61) target = $region29
    $region28: #{tpu_custom_call.1} parent=1 // pred_region
      %64 = vst [vmem:[#allocation2] sm:$0xff] 0.0
      %65 = vst [vmem:[#allocation2 + $0x8] sm:$0xff] 0.0
      %66 = vst [vmem:[#allocation2 + $0x10] sm:$0xff] 0.0
      %67 = vst [vmem:[#allocation2 + $0x18] sm:$0xff] 0.0
      %68 = vst [vmem:[#allocation2 + $0x20] sm:$0xff] 0.0
      %69 = vst [vmem:[#allocation2 + $0x28] sm:$0xff] 0.0
      %70 = vst [vmem:[#allocation2 + $0x30] sm:$0xff] 0.0
      %71 = vst [vmem:[#allocation2 + $0x38] sm:$0xff] 0.0
      %72 = vst [vmem:[#allocation2 + $0x40] sm:$0xff] 0.0
      %73 = vst [vmem:[#allocation2 + $0x48] sm:$0xff] 0.0
      %74 = vst [vmem:[#allocation2 + $0x50] sm:$0xff] 0.0
      %75 = vst [vmem:[#allocation2 + $0x58] sm:$0xff] 0.0
      %76 = vst [vmem:[#allocation2 + $0x60] sm:$0xff] 0.0
      %77 = vst [vmem:[#allocation2 + $0x68] sm:$0xff] 0.0
      %78 = vst [vmem:[#allocation2 + $0x70] sm:$0xff] 0.0
      %79 = vst [vmem:[#allocation2 + $0x78] sm:$0xff] 0.0
      %80 = vst [vmem:[#allocation2 + $0x80] sm:$0xff] 0.0
      %81 = vst [vmem:[#allocation2 + $0x88] sm:$0xff] 0.0
      %82 = vst [vmem:[#allocation2 + $0x90] sm:$0xff] 0.0
      %83 = vst [vmem:[#allocation2 + $0x98] sm:$0xff] 0.0
      %84 = vst [vmem:[#allocation2 + $0xa0] sm:$0xff] 0.0
      %85 = vst [vmem:[#allocation2 + $0xa8] sm:$0xff] 0.0
      %86 = vst [vmem:[#allocation2 + $0xb0] sm:$0xff] 0.0
      %87 = vst [vmem:[#allocation2 + $0xb8] sm:$0xff] 0.0
      %88 = vst [vmem:[#allocation2 + $0xc0] sm:$0xff] 0.0
      %89 = vst [vmem:[#allocation2 + $0xc8] sm:$0xff] 0.0
      %90 = vst [vmem:[#allocation2 + $0xd0] sm:$0xff] 0.0
      %91 = vst [vmem:[#allocation2 + $0xd8] sm:$0xff] 0.0
      %92 = vst [vmem:[#allocation2 + $0xe0] sm:$0xff] 0.0
      %93 = vst [vmem:[#allocation2 + $0xe8] sm:$0xff] 0.0
      %94 = vst [vmem:[#allocation2 + $0xf0] sm:$0xff] 0.0
      %95 = vst [vmem:[#allocation2 + $0xf8] sm:$0xff] 0.0
    $region29: #{tpu_custom_call.1} parent=1 // pred_fallthru
      _
    %v96 = vld [vmem:[#allocation2] sm:$0xff]
    %v97 = vld [vmem:[#allocation2 + $0x8] sm:$0xff]
    %v98 = vld [vmem:[#allocation2 + $0x10] sm:$0xff]
    %v99 = vld [vmem:[#allocation2 + $0x18] sm:$0xff]
    %v100 = vld [vmem:[#allocation2 + $0x20] sm:$0xff]
    %v101 = vld [vmem:[#allocation2 + $0x28] sm:$0xff]
    %v102 = vld [vmem:[#allocation2 + $0x30] sm:$0xff]
    %v103 = vld [vmem:[#allocation2 + $0x38] sm:$0xff]
    %v104 = vld [vmem:[#allocation2 + $0x40] sm:$0xff]
    %v105 = vld [vmem:[#allocation2 + $0x48] sm:$0xff]
    %v106 = vld [vmem:[#allocation2 + $0x50] sm:$0xff]
    %v107 = vld [vmem:[#allocation2 + $0x58] sm:$0xff]
    %v108 = vld [vmem:[#allocation2 + $0x60] sm:$0xff]
    %v109 = vld [vmem:[#allocation2 + $0x68] sm:$0xff]
    %v110 = vld [vmem:[#allocation2 + $0x70] sm:$0xff]
    %v111 = vld [vmem:[#allocation2 + $0x78] sm:$0xff]
    %v112 = vld [vmem:[#allocation2 + $0x80] sm:$0xff]
    %v113 = vld [vmem:[#allocation2 + $0x88] sm:$0xff]
    %v114 = vld [vmem:[#allocation2 + $0x90] sm:$0xff]
    %v115 = vld [vmem:[#allocation2 + $0x98] sm:$0xff]
    %v116 = vld [vmem:[#allocation2 + $0xa0] sm:$0xff]
    %v117 = vld [vmem:[#allocation2 + $0xa8] sm:$0xff]
    %v118 = vld [vmem:[#allocation2 + $0xb0] sm:$0xff]
    %v119 = vld [vmem:[#allocation2 + $0xb8] sm:$0xff]
    %v120 = vld [vmem:[#allocation2 + $0xc0] sm:$0xff]
    %v121 = vld [vmem:[#allocation2 + $0xc8] sm:$0xff]
    %v122 = vld [vmem:[#allocation2 + $0xd0] sm:$0xff]
    %v123 = vld [vmem:[#allocation2 + $0xd8] sm:$0xff]
    %v124 = vld [vmem:[#allocation2 + $0xe0] sm:$0xff]
    %v125 = vld [vmem:[#allocation2 + $0xe8] sm:$0xff]
    %v126 = vld [vmem:[#allocation2 + $0xf0] sm:$0xff]
    %v127 = vld [vmem:[#allocation2 + $0xf8] sm:$0xff]
    %v128 = vld [vmem:[#allocation3] sm:$0xf]
    %v129 = vld [vmem:[#allocation3 + $0x4] sm:$0xf]
    %v130 = vld [vmem:[#allocation3 + $0x8] sm:$0xf]
    %v131 = vld [vmem:[#allocation3 + $0xc] sm:$0xf]
    %v132 = vld [vmem:[#allocation6] sm:$0xff]
    %v133 = vld [vmem:[#allocation6 + $0x8] sm:$0xff]
    %v134 = vld [vmem:[#allocation6 + $0x10] sm:$0xff]
    %v135 = vld [vmem:[#allocation6 + $0x18] sm:$0xff]
    %v136 = vld [vmem:[#allocation6 + $0x20] sm:$0xff]
    %v137 = vld [vmem:[#allocation6 + $0x28] sm:$0xff]
    %v138 = vld [vmem:[#allocation6 + $0x30] sm:$0xff]
    %v139 = vld [vmem:[#allocation6 + $0x38] sm:$0xff]
    %v140 = vld [vmem:[#allocation6 + $0x40] sm:$0xff]
    %v141 = vld [vmem:[#allocation6 + $0x48] sm:$0xff]
    %v142 = vld [vmem:[#allocation6 + $0x50] sm:$0xff]
    %v143 = vld [vmem:[#allocation6 + $0x58] sm:$0xff]
    %v144 = vld [vmem:[#allocation6 + $0x60] sm:$0xff]
    %v145 = vld [vmem:[#allocation6 + $0x68] sm:$0xff]
    %v146 = vld [vmem:[#allocation6 + $0x70] sm:$0xff]
    %v147 = vld [vmem:[#allocation6 + $0x78] sm:$0xff]
    %v148 = vld [vmem:[#allocation6 + $0x80] sm:$0xff]
    %v149 = vld [vmem:[#allocation6 + $0x88] sm:$0xff]
    %v150 = vld [vmem:[#allocation6 + $0x90] sm:$0xff]
    %v151 = vld [vmem:[#allocation6 + $0x98] sm:$0xff]
    %v152 = vld [vmem:[#allocation6 + $0xa0] sm:$0xff]
    %v153 = vld [vmem:[#allocation6 + $0xa8] sm:$0xff]
    %v154 = vld [vmem:[#allocation6 + $0xb0] sm:$0xff]
    %v155 = vld [vmem:[#allocation6 + $0xb8] sm:$0xff]
    %v156 = vld [vmem:[#allocation6 + $0xc0] sm:$0xff]
    %v157 = vld [vmem:[#allocation6 + $0xc8] sm:$0xff]
    %v158 = vld [vmem:[#allocation6 + $0xd0] sm:$0xff]
    %v159 = vld [vmem:[#allocation6 + $0xd8] sm:$0xff]
    %v160 = vld [vmem:[#allocation6 + $0xe0] sm:$0xff]
    %v161 = vld [vmem:[#allocation6 + $0xe8] sm:$0xff]
    %v162 = vld [vmem:[#allocation6 + $0xf0] sm:$0xff]
    %v163 = vld [vmem:[#allocation6 + $0xf8] sm:$0xff]
    %v164 = vld [vmem:[#allocation6 + $0x100] sm:$0xff]
    %v165 = vld [vmem:[#allocation6 + $0x108] sm:$0xff]
    %v166 = vld [vmem:[#allocation6 + $0x110] sm:$0xff]
    %v167 = vld [vmem:[#allocation6 + $0x118] sm:$0xff]
    %v168 = vld [vmem:[#allocation6 + $0x120] sm:$0xff]
    %v169 = vld [vmem:[#allocation6 + $0x128] sm:$0xff]
    %v170 = vld [vmem:[#allocation6 + $0x130] sm:$0xff]
    %v171 = vld [vmem:[#allocation6 + $0x138] sm:$0xff]
    %v172 = vld [vmem:[#allocation6 + $0x140] sm:$0xff]
    %v173 = vld [vmem:[#allocation6 + $0x148] sm:$0xff]
    %v174 = vld [vmem:[#allocation6 + $0x150] sm:$0xff]
    %v175 = vld [vmem:[#allocation6 + $0x158] sm:$0xff]
    %v176 = vld [vmem:[#allocation6 + $0x160] sm:$0xff]
    %v177 = vld [vmem:[#allocation6 + $0x168] sm:$0xff]
    %v178 = vld [vmem:[#allocation6 + $0x170] sm:$0xff]
    %v179 = vld [vmem:[#allocation6 + $0x178] sm:$0xff]
    %v180 = vld [vmem:[#allocation6 + $0x180] sm:$0xff]
    %v181 = vld [vmem:[#allocation6 + $0x188] sm:$0xff]
    %v182 = vld [vmem:[#allocation6 + $0x190] sm:$0xff]
    %v183 = vld [vmem:[#allocation6 + $0x198] sm:$0xff]
    %v184 = vld [vmem:[#allocation6 + $0x1a0] sm:$0xff]
    %v185 = vld [vmem:[#allocation6 + $0x1a8] sm:$0xff]
    %v186 = vld [vmem:[#allocation6 + $0x1b0] sm:$0xff]
    %v187 = vld [vmem:[#allocation6 + $0x1b8] sm:$0xff]
    %v188 = vld [vmem:[#allocation6 + $0x1c0] sm:$0xff]
    %v189 = vld [vmem:[#allocation6 + $0x1c8] sm:$0xff]
    %v190 = vld [vmem:[#allocation6 + $0x1d0] sm:$0xff]
    %v191 = vld [vmem:[#allocation6 + $0x1d8] sm:$0xff]
    %v192 = vld [vmem:[#allocation6 + $0x1e0] sm:$0xff]
    %v193 = vld [vmem:[#allocation6 + $0x1e8] sm:$0xff]
    %v194 = vld [vmem:[#allocation6 + $0x1f0] sm:$0xff]
    %v195 = vld [vmem:[#allocation6 + $0x1f8] sm:$0xff]
    %v200 = vunpack.c.l.b16 %v128
    %v201 = vunpack.c.l.b16 %v129
    %v202 = vunpack.c.l.b16 %v130
    %v203 = vunpack.c.l.b16 %v131
    %v204 = vpack.c.b16 %v201, %v200
    %v205 = vpack.c.b16 %v203, %v202
    %v272 = vunpack.c.l.b16 %v132
    %v273 = vunpack.c.h.b16 %v132
    %v274 = vunpack.c.l.b16 %v133
    %v275 = vunpack.c.h.b16 %v133
    %v276 = vunpack.c.l.b16 %v134
    %v277 = vunpack.c.h.b16 %v134
    %v278 = vunpack.c.l.b16 %v135
    %v279 = vunpack.c.h.b16 %v135
    %v280 = vunpack.c.l.b16 %v136
    %v281 = vunpack.c.h.b16 %v136
    %v282 = vunpack.c.l.b16 %v137
    %v283 = vunpack.c.h.b16 %v137
    %v284 = vunpack.c.l.b16 %v138
    %v285 = vunpack.c.h.b16 %v138
    %v286 = vunpack.c.l.b16 %v139
    %v287 = vunpack.c.h.b16 %v139
    %v288 = vunpack.c.l.b16 %v140
    %v289 = vunpack.c.h.b16 %v140
    %v290 = vunpack.c.l.b16 %v141
    %v291 = vunpack.c.h.b16 %v141
    %v292 = vunpack.c.l.b16 %v142
    %v293 = vunpack.c.h.b16 %v142
    %v294 = vunpack.c.l.b16 %v143
    %v295 = vunpack.c.h.b16 %v143
    %v296 = vunpack.c.l.b16 %v144
    %v297 = vunpack.c.h.b16 %v144
    %v298 = vunpack.c.l.b16 %v145
    %v299 = vunpack.c.h.b16 %v145
    %v300 = vunpack.c.l.b16 %v146
    %v301 = vunpack.c.h.b16 %v146
    %v302 = vunpack.c.l.b16 %v147
    %v303 = vunpack.c.h.b16 %v147
    %v304 = vunpack.c.l.b16 %v148
    %v305 = vunpack.c.h.b16 %v148
    %v306 = vunpack.c.l.b16 %v149
    %v307 = vunpack.c.h.b16 %v149
    %v308 = vunpack.c.l.b16 %v150
    %v309 = vunpack.c.h.b16 %v150
    %v310 = vunpack.c.l.b16 %v151
    %v311 = vunpack.c.h.b16 %v151
    %v312 = vunpack.c.l.b16 %v152
    %v313 = vunpack.c.h.b16 %v152
    %v314 = vunpack.c.l.b16 %v153
    %v315 = vunpack.c.h.b16 %v153
    %v316 = vunpack.c.l.b16 %v154
    %v317 = vunpack.c.h.b16 %v154
    %v318 = vunpack.c.l.b16 %v155
    %v319 = vunpack.c.h.b16 %v155
    %v320 = vunpack.c.l.b16 %v156
    %v321 = vunpack.c.h.b16 %v156
    %v322 = vunpack.c.l.b16 %v157
    %v323 = vunpack.c.h.b16 %v157
    %v324 = vunpack.c.l.b16 %v158
    %v325 = vunpack.c.h.b16 %v158
    %v326 = vunpack.c.l.b16 %v159
    %v327 = vunpack.c.h.b16 %v159
    %v328 = vunpack.c.l.b16 %v160
    %v329 = vunpack.c.h.b16 %v160
    %v330 = vunpack.c.l.b16 %v161
    %v331 = vunpack.c.h.b16 %v161
    %v332 = vunpack.c.l.b16 %v162
    %v333 = vunpack.c.h.b16 %v162
    %v334 = vunpack.c.l.b16 %v163
    %v335 = vunpack.c.h.b16 %v163
    %v336 = vunpack.c.l.b16 %v164
    %v337 = vunpack.c.h.b16 %v164
    %v338 = vunpack.c.l.b16 %v165
    %v339 = vunpack.c.h.b16 %v165
    %v340 = vunpack.c.l.b16 %v166
    %v341 = vunpack.c.h.b16 %v166
    %v342 = vunpack.c.l.b16 %v167
    %v343 = vunpack.c.h.b16 %v167
    %v344 = vunpack.c.l.b16 %v168
    %v345 = vunpack.c.h.b16 %v168
    %v346 = vunpack.c.l.b16 %v169
    %v347 = vunpack.c.h.b16 %v169
    %v348 = vunpack.c.l.b16 %v170
    %v349 = vunpack.c.h.b16 %v170
    %v350 = vunpack.c.l.b16 %v171
    %v351 = vunpack.c.h.b16 %v171
    %v352 = vunpack.c.l.b16 %v172
    %v353 = vunpack.c.h.b16 %v172
    %v354 = vunpack.c.l.b16 %v173
    %v355 = vunpack.c.h.b16 %v173
    %v356 = vunpack.c.l.b16 %v174
    %v357 = vunpack.c.h.b16 %v174
    %v358 = vunpack.c.l.b16 %v175
    %v359 = vunpack.c.h.b16 %v175
    %v360 = vunpack.c.l.b16 %v176
    %v361 = vunpack.c.h.b16 %v176
    %v362 = vunpack.c.l.b16 %v177
    %v363 = vunpack.c.h.b16 %v177
    %v364 = vunpack.c.l.b16 %v178
    %v365 = vunpack.c.h.b16 %v178
    %v366 = vunpack.c.l.b16 %v179
    %v367 = vunpack.c.h.b16 %v179
    %v368 = vunpack.c.l.b16 %v180
    %v369 = vunpack.c.h.b16 %v180
    %v370 = vunpack.c.l.b16 %v181
    %v371 = vunpack.c.h.b16 %v181
    %v372 = vunpack.c.l.b16 %v182
    %v373 = vunpack.c.h.b16 %v182
    %v374 = vunpack.c.l.b16 %v183
    %v375 = vunpack.c.h.b16 %v183
    %v376 = vunpack.c.l.b16 %v184
    %v377 = vunpack.c.h.b16 %v184
    %v378 = vunpack.c.l.b16 %v185
    %v379 = vunpack.c.h.b16 %v185
    %v380 = vunpack.c.l.b16 %v186
    %v381 = vunpack.c.h.b16 %v186
    %v382 = vunpack.c.l.b16 %v187
    %v383 = vunpack.c.h.b16 %v187
    %v384 = vunpack.c.l.b16 %v188
    %v385 = vunpack.c.h.b16 %v188
    %v386 = vunpack.c.l.b16 %v189
    %v387 = vunpack.c.h.b16 %v189
    %v388 = vunpack.c.l.b16 %v190
    %v389 = vunpack.c.h.b16 %v190
    %v390 = vunpack.c.l.b16 %v191
    %v391 = vunpack.c.h.b16 %v191
    %v392 = vunpack.c.l.b16 %v192
    %v393 = vunpack.c.h.b16 %v192
    %v394 = vunpack.c.l.b16 %v193
    %v395 = vunpack.c.h.b16 %v193
    %v396 = vunpack.c.l.b16 %v194
    %v397 = vunpack.c.h.b16 %v194
    %v398 = vunpack.c.l.b16 %v195
    %v399 = vunpack.c.h.b16 %v195
    %v400 = vpack.c.b16 %v280, %v272
    %v401 = vpack.c.b16 %v281, %v273
    %v402 = vpack.c.b16 %v282, %v274
    %v403 = vpack.c.b16 %v283, %v275
    %v404 = vpack.c.b16 %v284, %v276
    %v405 = vpack.c.b16 %v285, %v277
    %v406 = vpack.c.b16 %v286, %v278
    %v407 = vpack.c.b16 %v287, %v279
    %v408 = vpack.c.b16 %v296, %v288
    %v409 = vpack.c.b16 %v297, %v289
    %v410 = vpack.c.b16 %v298, %v290
    %v411 = vpack.c.b16 %v299, %v291
    %v412 = vpack.c.b16 %v300, %v292
    %v413 = vpack.c.b16 %v301, %v293
    %v414 = vpack.c.b16 %v302, %v294
    %v415 = vpack.c.b16 %v303, %v295
    %v416 = vpack.c.b16 %v312, %v304
    %v417 = vpack.c.b16 %v313, %v305
    %v418 = vpack.c.b16 %v314, %v306
    %v419 = vpack.c.b16 %v315, %v307
    %v420 = vpack.c.b16 %v316, %v308
    %v421 = vpack.c.b16 %v317, %v309
    %v422 = vpack.c.b16 %v318, %v310
    %v423 = vpack.c.b16 %v319, %v311
    %v424 = vpack.c.b16 %v328, %v320
    %v425 = vpack.c.b16 %v329, %v321
    %v426 = vpack.c.b16 %v330, %v322
    %v427 = vpack.c.b16 %v331, %v323
    %v428 = vpack.c.b16 %v332, %v324
    %v429 = vpack.c.b16 %v333, %v325
    %v430 = vpack.c.b16 %v334, %v326
    %v431 = vpack.c.b16 %v335, %v327
    %v432 = vpack.c.b16 %v344, %v336
    %v433 = vpack.c.b16 %v345, %v337
    %v434 = vpack.c.b16 %v346, %v338
    %v435 = vpack.c.b16 %v347, %v339
    %v436 = vpack.c.b16 %v348, %v340
    %v437 = vpack.c.b16 %v349, %v341
    %v438 = vpack.c.b16 %v350, %v342
    %v439 = vpack.c.b16 %v351, %v343
    %v440 = vpack.c.b16 %v360, %v352
    %v441 = vpack.c.b16 %v361, %v353
    %v442 = vpack.c.b16 %v362, %v354
    %v443 = vpack.c.b16 %v363, %v355
    %v444 = vpack.c.b16 %v364, %v356
    %v445 = vpack.c.b16 %v365, %v357
    %v446 = vpack.c.b16 %v366, %v358
    %v447 = vpack.c.b16 %v367, %v359
    %v448 = vpack.c.b16 %v376, %v368
    %v449 = vpack.c.b16 %v377, %v369
    %v450 = vpack.c.b16 %v378, %v370
    %v451 = vpack.c.b16 %v379, %v371
    %v452 = vpack.c.b16 %v380, %v372
    %v453 = vpack.c.b16 %v381, %v373
    %v454 = vpack.c.b16 %v382, %v374
    %v455 = vpack.c.b16 %v383, %v375
    %v456 = vpack.c.b16 %v392, %v384
    %v457 = vpack.c.b16 %v393, %v385
    %v458 = vpack.c.b16 %v394, %v386
    %v459 = vpack.c.b16 %v395, %v387
    %v460 = vpack.c.b16 %v396, %v388
    %v461 = vpack.c.b16 %v397, %v389
    %v462 = vpack.c.b16 %v398, %v390
    %v463 = vpack.c.b16 %v399, %v391
    %528 = vmatpush.bf16.msra.mxu0 %v456
    %529 = vmatpush.bf16.msra.mxu0 %v448
    %530 = vmatpush.bf16.msra.mxu0 %v440
    %531 = vmatpush.bf16.msra.mxu0 %v432
    %532 = vmatpush.bf16.msra.mxu0 %v424
    %533 = vmatpush.bf16.msra.mxu0 %v416
    %534 = vmatpush.bf16.msra.mxu0 %v408
    %535 = vmatpush.bf16.msra.mxu0 %v400
    %536 = vmatmul.bf16.gmra.mxu0 %v204
    %v537 = vpop.f32.mrf.mxu0
    %v538 = vadd.f32 0.0, %v537
    %v539 = vpop.f32.mrf.mxu0
    %v540 = vadd.f32 0.0, %v539
    %541 = vmatmul.bf16.gmra.mxu0 %v205
    %v542 = vpop.f32.mrf.mxu0
    %v543 = vadd.f32 0.0, %v542
    %v544 = vpop.f32.mrf.mxu0
    %v545 = vadd.f32 0.0, %v544
    %546 = vdwg.mxu0
    %547 = vmatpush.bf16.msra.mxu0 %v457
    %548 = vmatpush.bf16.msra.mxu0 %v449
    %549 = vmatpush.bf16.msra.mxu0 %v441
    %550 = vmatpush.bf16.msra.mxu0 %v433
    %551 = vmatpush.bf16.msra.mxu0 %v425
    %552 = vmatpush.bf16.msra.mxu0 %v417
    %553 = vmatpush.bf16.msra.mxu0 %v409
    %554 = vmatpush.bf16.msra.mxu0 %v401
    %555 = vmatmul.bf16.gmra.mxu0 %v204
    %v556 = vpop.f32.mrf.mxu0
    %v557 = vadd.f32 0.0, %v556
    %v558 = vpop.f32.mrf.mxu0
    %v559 = vadd.f32 0.0, %v558
    %560 = vmatmul.bf16.gmra.mxu0 %v205
    %v561 = vpop.f32.mrf.mxu0
    %v562 = vadd.f32 0.0, %v561
    %v563 = vpop.f32.mrf.mxu0
    %v564 = vadd.f32 0.0, %v563
    %565 = vdwg.mxu0
    %566 = vmatpush.bf16.msra.mxu0 %v458
    %567 = vmatpush.bf16.msra.mxu0 %v450
    %568 = vmatpush.bf16.msra.mxu0 %v442
    %569 = vmatpush.bf16.msra.mxu0 %v434
    %570 = vmatpush.bf16.msra.mxu0 %v426
    %571 = vmatpush.bf16.msra.mxu0 %v418
    %572 = vmatpush.bf16.msra.mxu0 %v410
    %573 = vmatpush.bf16.msra.mxu0 %v402
    %574 = vmatmul.bf16.gmra.mxu0 %v204
    %v575 = vpop.f32.mrf.mxu0
    %v576 = vadd.f32 0.0, %v575
    %v577 = vpop.f32.mrf.mxu0
    %v578 = vadd.f32 0.0, %v577
    %579 = vmatmul.bf16.gmra.mxu0 %v205
    %v580 = vpop.f32.mrf.mxu0
    %v581 = vadd.f32 0.0, %v580
    %v582 = vpop.f32.mrf.mxu0
    %v583 = vadd.f32 0.0, %v582
    %584 = vdwg.mxu0
    %585 = vmatpush.bf16.msra.mxu0 %v459
    %586 = vmatpush.bf16.msra.mxu0 %v451
    %587 = vmatpush.bf16.msra.mxu0 %v443
    %588 = vmatpush.bf16.msra.mxu0 %v435
    %589 = vmatpush.bf16.msra.mxu0 %v427
    %590 = vmatpush.bf16.msra.mxu0 %v419
    %591 = vmatpush.bf16.msra.mxu0 %v411
    %592 = vmatpush.bf16.msra.mxu0 %v403
    %593 = vmatmul.bf16.gmra.mxu0 %v204
    %v594 = vpop.f32.mrf.mxu0
    %v595 = vadd.f32 0.0, %v594
    %v596 = vpop.f32.mrf.mxu0
    %v597 = vadd.f32 0.0, %v596
    %598 = vmatmul.bf16.gmra.mxu0 %v205
    %v599 = vpop.f32.mrf.mxu0
    %v600 = vadd.f32 0.0, %v599
    %v601 = vpop.f32.mrf.mxu0
    %v602 = vadd.f32 0.0, %v601
    %603 = vdwg.mxu0
    %604 = vmatpush.bf16.msra.mxu0 %v460
    %605 = vmatpush.bf16.msra.mxu0 %v452
    %606 = vmatpush.bf16.msra.mxu0 %v444
    %607 = vmatpush.bf16.msra.mxu0 %v436
    %608 = vmatpush.bf16.msra.mxu0 %v428
    %609 = vmatpush.bf16.msra.mxu0 %v420
    %610 = vmatpush.bf16.msra.mxu0 %v412
    %611 = vmatpush.bf16.msra.mxu0 %v404
    %612 = vmatmul.bf16.gmra.mxu0 %v204
    %v613 = vpop.f32.mrf.mxu0
    %v614 = vadd.f32 0.0, %v613
    %v615 = vpop.f32.mrf.mxu0
    %v616 = vadd.f32 0.0, %v615
    %617 = vmatmul.bf16.gmra.mxu0 %v205
    %v618 = vpop.f32.mrf.mxu0
    %v619 = vadd.f32 0.0, %v618
    %v620 = vpop.f32.mrf.mxu0
    %v621 = vadd.f32 0.0, %v620
    %622 = vdwg.mxu0
    %623 = vmatpush.bf16.msra.mxu0 %v461
    %624 = vmatpush.bf16.msra.mxu0 %v453
    %625 = vmatpush.bf16.msra.mxu0 %v445
    %626 = vmatpush.bf16.msra.mxu0 %v437
    %627 = vmatpush.bf16.msra.mxu0 %v429
    %628 = vmatpush.bf16.msra.mxu0 %v421
    %629 = vmatpush.bf16.msra.mxu0 %v413
    %630 = vmatpush.bf16.msra.mxu0 %v405
    %631 = vmatmul.bf16.gmra.mxu0 %v204
    %v632 = vpop.f32.mrf.mxu0
    %v633 = vadd.f32 0.0, %v632
    %v634 = vpop.f32.mrf.mxu0
    %v635 = vadd.f32 0.0, %v634
    %636 = vmatmul.bf16.gmra.mxu0 %v205
    %v637 = vpop.f32.mrf.mxu0
    %v638 = vadd.f32 0.0, %v637
    %v639 = vpop.f32.mrf.mxu0
    %v640 = vadd.f32 0.0, %v639
    %641 = vdwg.mxu0
    %642 = vmatpush.bf16.msra.mxu0 %v462
    %643 = vmatpush.bf16.msra.mxu0 %v454
    %644 = vmatpush.bf16.msra.mxu0 %v446
    %645 = vmatpush.bf16.msra.mxu0 %v438
    %646 = vmatpush.bf16.msra.mxu0 %v430
    %647 = vmatpush.bf16.msra.mxu0 %v422
    %648 = vmatpush.bf16.msra.mxu0 %v414
    %649 = vmatpush.bf16.msra.mxu0 %v406
    %650 = vmatmul.bf16.gmra.mxu0 %v204
    %v651 = vpop.f32.mrf.mxu0
    %v652 = vadd.f32 0.0, %v651
    %v653 = vpop.f32.mrf.mxu0
    %v654 = vadd.f32 0.0, %v653
    %655 = vmatmul.bf16.gmra.mxu0 %v205
    %v656 = vpop.f32.mrf.mxu0
    %v657 = vadd.f32 0.0, %v656
    %v658 = vpop.f32.mrf.mxu0
    %v659 = vadd.f32 0.0, %v658
    %660 = vdwg.mxu0
    %661 = vmatpush.bf16.msra.mxu0 %v463
    %662 = vmatpush.bf16.msra.mxu0 %v455
    %663 = vmatpush.bf16.msra.mxu0 %v447
    %664 = vmatpush.bf16.msra.mxu0 %v439
    %665 = vmatpush.bf16.msra.mxu0 %v431
    %666 = vmatpush.bf16.msra.mxu0 %v423
    %667 = vmatpush.bf16.msra.mxu0 %v415
    %668 = vmatpush.bf16.msra.mxu0 %v407
    %669 = vmatmul.bf16.gmra.mxu0 %v204
    %v670 = vpop.f32.mrf.mxu0
    %v671 = vadd.f32 0.0, %v670
    %v672 = vpop.f32.mrf.mxu0
    %v673 = vadd.f32 0.0, %v672
    %674 = vmatmul.bf16.gmra.mxu0 %v205
    %v675 = vpop.f32.mrf.mxu0
    %v676 = vadd.f32 0.0, %v675
    %v677 = vpop.f32.mrf.mxu0
    %v678 = vadd.f32 0.0, %v677
    %679 = vdwg.mxu0
    %v680 = vadd.f32 %v96, %v538
    %v681 = vadd.f32 %v97, %v557
    %v682 = vadd.f32 %v98, %v576
    %v683 = vadd.f32 %v99, %v595
    %v684 = vadd.f32 %v100, %v614
    %v685 = vadd.f32 %v101, %v633
    %v686 = vadd.f32 %v102, %v652
    %v687 = vadd.f32 %v103, %v671
    %v688 = vadd.f32 %v104, %v540
    %v689 = vadd.f32 %v105, %v559
    %v690 = vadd.f32 %v106, %v578
    %v691 = vadd.f32 %v107, %v597
    %v692 = vadd.f32 %v108, %v616
    %v693 = vadd.f32 %v109, %v635
    %v694 = vadd.f32 %v110, %v654
    %v695 = vadd.f32 %v111, %v673
    %v696 = vadd.f32 %v112, %v543
    %v697 = vadd.f32 %v113, %v562
    %v698 = vadd.f32 %v114, %v581
    %v699 = vadd.f32 %v115, %v600
    %v700 = vadd.f32 %v116, %v619
    %v701 = vadd.f32 %v117, %v638
    %v702 = vadd.f32 %v118, %v657
    %v703 = vadd.f32 %v119, %v676
    %v704 = vadd.f32 %v120, %v545
    %v705 = vadd.f32 %v121, %v564
    %v706 = vadd.f32 %v122, %v583
    %v707 = vadd.f32 %v123, %v602
    %v708 = vadd.f32 %v124, %v621
    %v709 = vadd.f32 %v125, %v640
    %v710 = vadd.f32 %v126, %v659
    %v711 = vadd.f32 %v127, %v678
    %712 = vst [vmem:[#allocation2] sm:$0xff] %v680
    %713 = vst [vmem:[#allocation2 + $0x8] sm:$0xff] %v681
    %714 = vst [vmem:[#allocation2 + $0x10] sm:$0xff] %v682
    %715 = vst [vmem:[#allocation2 + $0x18] sm:$0xff] %v683
    %716 = vst [vmem:[#allocation2 + $0x20] sm:$0xff] %v684
    %717 = vst [vmem:[#allocation2 + $0x28] sm:$0xff] %v685
    %718 = vst [vmem:[#allocation2 + $0x30] sm:$0xff] %v686
    %719 = vst [vmem:[#allocation2 + $0x38] sm:$0xff] %v687
    %720 = vst [vmem:[#allocation2 + $0x40] sm:$0xff] %v688
    %721 = vst [vmem:[#allocation2 + $0x48] sm:$0xff] %v689
    %722 = vst [vmem:[#allocation2 + $0x50] sm:$0xff] %v690
    %723 = vst [vmem:[#allocation2 + $0x58] sm:$0xff] %v691
    %724 = vst [vmem:[#allocation2 + $0x60] sm:$0xff] %v692
    %725 = vst [vmem:[#allocation2 + $0x68] sm:$0xff] %v693
    %726 = vst [vmem:[#allocation2 + $0x70] sm:$0xff] %v694
    %727 = vst [vmem:[#allocation2 + $0x78] sm:$0xff] %v695
    %728 = vst [vmem:[#allocation2 + $0x80] sm:$0xff] %v696
    %729 = vst [vmem:[#allocation2 + $0x88] sm:$0xff] %v697
    %730 = vst [vmem:[#allocation2 + $0x90] sm:$0xff] %v698
    %731 = vst [vmem:[#allocation2 + $0x98] sm:$0xff] %v699
    %732 = vst [vmem:[#allocation2 + $0xa0] sm:$0xff] %v700
    %733 = vst [vmem:[#allocation2 + $0xa8] sm:$0xff] %v701
    %734 = vst [vmem:[#allocation2 + $0xb0] sm:$0xff] %v702
    %735 = vst [vmem:[#allocation2 + $0xb8] sm:$0xff] %v703
    %736 = vst [vmem:[#allocation2 + $0xc0] sm:$0xff] %v704
    %737 = vst [vmem:[#allocation2 + $0xc8] sm:$0xff] %v705
    %738 = vst [vmem:[#allocation2 + $0xd0] sm:$0xff] %v706
    %739 = vst [vmem:[#allocation2 + $0xd8] sm:$0xff] %v707
    %740 = vst [vmem:[#allocation2 + $0xe0] sm:$0xff] %v708
    %741 = vst [vmem:[#allocation2 + $0xe8] sm:$0xff] %v709
    %742 = vst [vmem:[#allocation2 + $0xf0] sm:$0xff] %v710
    %743 = vst [vmem:[#allocation2 + $0xf8] sm:$0xff] %v711
    // Predicated region
    $region30: #{tpu_custom_call.1} parent=1 // pred_check
      %p744 = pneg %p60
    $region31: #{tpu_custom_call.1} parent=1 // pred_check_branch
      %746 = sbr.rel (%p744) target = $region33
    $region32: #{tpu_custom_call.1} parent=1 // pred_region
      %v747 = vld [vmem:[#allocation2] sm:$0xff]
      %v748 = vld [vmem:[#allocation2 + $0x8] sm:$0xff]
      %v749 = vld [vmem:[#allocation2 + $0x10] sm:$0xff]
      %v750 = vld [vmem:[#allocation2 + $0x18] sm:$0xff]
      %v751 = vld [vmem:[#allocation2 + $0x20] sm:$0xff]
      %v752 = vld [vmem:[#allocation2 + $0x28] sm:$0xff]
      %v753 = vld [vmem:[#allocation2 + $0x30] sm:$0xff]
      %v754 = vld [vmem:[#allocation2 + $0x38] sm:$0xff]
      %v755 = vld [vmem:[#allocation2 + $0x40] sm:$0xff]
      %v756 = vld [vmem:[#allocation2 + $0x48] sm:$0xff]
      %v757 = vld [vmem:[#allocation2 + $0x50] sm:$0xff]
      %v758 = vld [vmem:[#allocation2 + $0x58] sm:$0xff]
      %v759 = vld [vmem:[#allocation2 + $0x60] sm:$0xff]
      %v760 = vld [vmem:[#allocation2 + $0x68] sm:$0xff]
      %v761 = vld [vmem:[#allocation2 + $0x70] sm:$0xff]
      %v762 = vld [vmem:[#allocation2 + $0x78] sm:$0xff]
      %v763 = vld [vmem:[#allocation2 + $0x80] sm:$0xff]
      %v764 = vld [vmem:[#allocation2 + $0x88] sm:$0xff]
      %v765 = vld [vmem:[#allocation2 + $0x90] sm:$0xff]
      %v766 = vld [vmem:[#allocation2 + $0x98] sm:$0xff]
      %v767 = vld [vmem:[#allocation2 + $0xa0] sm:$0xff]
      %v768 = vld [vmem:[#allocation2 + $0xa8] sm:$0xff]
      %v769 = vld [vmem:[#allocation2 + $0xb0] sm:$0xff]
      %v770 = vld [vmem:[#allocation2 + $0xb8] sm:$0xff]
      %v771 = vld [vmem:[#allocation2 + $0xc0] sm:$0xff]
      %v772 = vld [vmem:[#allocation2 + $0xc8] sm:$0xff]
      %v773 = vld [vmem:[#allocation2 + $0xd0] sm:$0xff]
      %v774 = vld [vmem:[#allocation2 + $0xd8] sm:$0xff]
      %v775 = vld [vmem:[#allocation2 + $0xe0] sm:$0xff]
      %v776 = vld [vmem:[#allocation2 + $0xe8] sm:$0xff]
      %v777 = vld [vmem:[#allocation2 + $0xf0] sm:$0xff]
      %v778 = vld [vmem:[#allocation2 + $0xf8] sm:$0xff]
      %v779 = vld [vmem:[#allocation8] sm:$0xff]
      %v781 = vperm.slane %v779, 0
      %v782 = vperm.slane %v779, 1
      %v783 = vperm.slane %v779, 2
      %v784 = vperm.slane %v779, 3
      %v785 = vperm.slane %v779, 4
      %v786 = vperm.slane %v779, 5
      %v787 = vperm.slane %v779, 6
      %v788 = vperm.slane %v779, 7
      %v797 = vadd.f32 %v747, %v781
      %v798 = vadd.f32 %v748, %v782
      %v799 = vadd.f32 %v749, %v783
      %v800 = vadd.f32 %v750, %v784
      %v801 = vadd.f32 %v751, %v785
      %v802 = vadd.f32 %v752, %v786
      %v803 = vadd.f32 %v753, %v787
      %v804 = vadd.f32 %v754, %v788
      %v805 = vadd.f32 %v755, %v781
      %v806 = vadd.f32 %v756, %v782
      %v807 = vadd.f32 %v757, %v783
      %v808 = vadd.f32 %v758, %v784
      %v809 = vadd.f32 %v759, %v785
      %v810 = vadd.f32 %v760, %v786
      %v811 = vadd.f32 %v761, %v787
      %v812 = vadd.f32 %v762, %v788
      %v813 = vadd.f32 %v763, %v781
      %v814 = vadd.f32 %v764, %v782
      %v815 = vadd.f32 %v765, %v783
      %v816 = vadd.f32 %v766, %v784
      %v817 = vadd.f32 %v767, %v785
      %v818 = vadd.f32 %v768, %v786
      %v819 = vadd.f32 %v769, %v787
      %v820 = vadd.f32 %v770, %v788
      %v821 = vadd.f32 %v771, %v781
      %v822 = vadd.f32 %v772, %v782
      %v823 = vadd.f32 %v773, %v783
      %v824 = vadd.f32 %v774, %v784
      %v825 = vadd.f32 %v775, %v785
      %v826 = vadd.f32 %v776, %v786
      %v827 = vadd.f32 %v777, %v787
      %v828 = vadd.f32 %v778, %v788
      %v829 = vpack.c.bf16 %v798, %v797
      %v830 = vpack.c.bf16 %v800, %v799
      %v831 = vpack.c.bf16 %v802, %v801
      %v832 = vpack.c.bf16 %v804, %v803
      %v833 = vpack.c.bf16 %v806, %v805
      %v834 = vpack.c.bf16 %v808, %v807
      %v835 = vpack.c.bf16 %v810, %v809
      %v836 = vpack.c.bf16 %v812, %v811
      %v837 = vpack.c.bf16 %v814, %v813
      %v838 = vpack.c.bf16 %v816, %v815
      %v839 = vpack.c.bf16 %v818, %v817
      %v840 = vpack.c.bf16 %v820, %v819
      %v841 = vpack.c.bf16 %v822, %v821
      %v842 = vpack.c.bf16 %v824, %v823
      %v843 = vpack.c.bf16 %v826, %v825
      %v844 = vpack.c.bf16 %v828, %v827
      %845 = vst [vmem:[#allocation9] sm:$0xff] %v829
      %846 = vst [vmem:[#allocation9 + $0x8] sm:$0xff] %v830
      %847 = vst [vmem:[#allocation9 + $0x10] sm:$0xff] %v831
      %848 = vst [vmem:[#allocation9 + $0x18] sm:$0xff] %v832
      %849 = vst [vmem:[#allocation9 + $0x20] sm:$0xff] %v833
      %850 = vst [vmem:[#allocation9 + $0x28] sm:$0xff] %v834
      %851 = vst [vmem:[#allocation9 + $0x30] sm:$0xff] %v835
      %852 = vst [vmem:[#allocation9 + $0x38] sm:$0xff] %v836
      %853 = vst [vmem:[#allocation9 + $0x40] sm:$0xff] %v837
      %854 = vst [vmem:[#allocation9 + $0x48] sm:$0xff] %v838
      %855 = vst [vmem:[#allocation9 + $0x50] sm:$0xff] %v839
      %856 = vst [vmem:[#allocation9 + $0x58] sm:$0xff] %v840
      %857 = vst [vmem:[#allocation9 + $0x60] sm:$0xff] %v841
      %858 = vst [vmem:[#allocation9 + $0x68] sm:$0xff] %v842
      %859 = vst [vmem:[#allocation9 + $0x70] sm:$0xff] %v843
      %860 = vst [vmem:[#allocation9 + $0x78] sm:$0xff] %v844
    $region33: #{tpu_custom_call.1} parent=1 // pred_fallthru
      _
    // Predicated region
    $region34: #{tpu_custom_call.1} parent=1 // pred_check
      _
    $region35: #{tpu_custom_call.1} parent=1 // pred_check_branch
      %862 = sbr.rel (0) target = $region37
    $region36: #{tpu_custom_call.1} parent=1 // pred_region
      %864 = vsyncadd [#allocation5], 0
      %s865 = sshll.u32 [#allocation9], 4
      %s866 = int_to_ptr.vmem [resolvable:$true] %s865
      %s867 = sshll.u32 %s3, 4
      %s868 = int_to_ptr.hbm [resolvable:$true] %s867
      %873 = dma.vmem_to_hbm [thread:$0]  %s866, 2048, %s868, [#allocation5], 512, 512, 32
    $region37: #{tpu_custom_call.1} parent=1 // pred_fallthru
      _
    // Predicated region
    $region38: #{tpu_custom_call.1} parent=1 // pred_check
      _
    $region39: #{tpu_custom_call.1} parent=1 // pred_check_branch
      %875 = sbr.rel (0) target = $region41
    $region40: #{tpu_custom_call.1} parent=1 // pred_region
      %877 = dma.done [#allocation5], 2048
    $region41: #{tpu_custom_call.1} parent=1 // pred_fallthru
      _
    %878 = vsyncpa [#allocation4], 1
    %879 = vsyncpa [#allocation7], 1
    %880 = vsyncpa [#allocation5], 1

</llo_original>
